<compile_context>
chip_gen: v7x
topology: tpu7x:2x2x1
jax: 0.10.0
libtpu: 0.0.40
codegen_flags: <defaults>
</compile_context>

<pallas_src>
import jax
import jax.numpy as jnp
from jax.experimental import pallas as pl
from jax.experimental.pallas import tpu as pltpu

LANE = 128          # vreg lane width
BF16_SUBLANE = 16   # fully packed bf16 vreg sublane count


def _round_up(n: int, m: int) -> int:
    return ((n + m - 1) // m) * m


def _vmem_capacity_bytes() -> int:
    try:
        return int(pltpu.get_tpu_info().vmem_capacity_bytes)
    except Exception:
        return 64 * 1024 * 1024   # conservative (v7x per-TC) fallback


def autoencoder_kernel(x_ref,
                       w1_ref, b1_ref,   # encoder Linear(D, H)
                       w2_ref, b2_ref,   # encoder Linear(H, K)
                       w3_ref, b3_ref,   # decoder Linear(K, H)
                       w4_ref, b4_ref,   # decoder Linear(H, D)
                       out_ref):
    x = x_ref[...]                                            # bf16 [TM, Dp]

    # encoder
    h1 = jnp.dot(x, w1_ref[...],
                 preferred_element_type=jnp.float32) + b1_ref[...]
    h1 = jnp.maximum(h1, 0.0)                                 # ReLU (f32)
    z = jnp.dot(h1.astype(jnp.bfloat16), w2_ref[...],
                preferred_element_type=jnp.float32) + b2_ref[...]

    # decoder
    h2 = jnp.dot(z.astype(jnp.bfloat16), w3_ref[...],
                 preferred_element_type=jnp.float32) + b3_ref[...]
    h2 = jnp.maximum(h2, 0.0)                                 # ReLU (f32)
    y = jnp.dot(h2.astype(jnp.bfloat16), w4_ref[...],
                preferred_element_type=jnp.float32) + b4_ref[...]

    out_ref[...] = y.astype(out_ref.dtype)


def prepare_params(params):
    """One-time param prep (call ONCE, reuse every forward).

    Pads every feature dim to a multiple of 128 (lane-dense) and casts matmul
    operands to bf16; biases stay f32. Padding columns are exactly zero so the
    padded lanes stay zero through ReLU and are sliced off in the wrapper.
    """
    D, H = params["w1"].shape
    K = params["w2"].shape[1]
    Dp, Hp, Kp = (_round_up(d, LANE) for d in (D, H, K))

    def pad2(a, rows, cols, dtype):
        return jnp.pad(a, ((0, rows - a.shape[0]),
                           (0, cols - a.shape[1]))).astype(dtype)

    padded = {
        "w1": pad2(params["w1"], Dp, Hp, jnp.bfloat16),
        "w2": pad2(params["w2"], Hp, Kp, jnp.bfloat16),
        "w3": pad2(params["w3"], Kp, Hp, jnp.bfloat16),
        "w4": pad2(params["w4"], Hp, Dp, jnp.bfloat16),
        "b1": pad2(params["b1"], 1, Hp, jnp.float32),
        "b2": pad2(params["b2"], 1, Kp, jnp.float32),
        "b3": pad2(params["b3"], 1, Hp, jnp.float32),
        "b4": pad2(params["b4"], 1, Dp, jnp.float32),
    }
    dims = {"D": D, "H": H, "K": K, "Dp": Dp, "Hp": Hp, "Kp": Kp}
    return padded, dims


def autoencoder_forward(x, padded, dims, *, block_rows=512,
                        out_dtype=jnp.bfloat16):
    """x: [B, D] float32.  padded/dims: output of prepare_params (cached)."""
    B, D = x.shape
    assert D == dims["D"], "input feature dim mismatch"
    Dp, Hp, Kp = dims["Dp"], dims["Hp"], dims["Kp"]

    # Batch tile: minimize padding and keep bf16 sublanes fully packed.
    n_tiles = max(1, pl.cdiv(B, block_rows))
    TM = _round_up(pl.cdiv(B, n_tiles), BF16_SUBLANE)
    Bp = _round_up(B, TM)

    xp = jnp.pad(x, ((0, Bp - B), (0, Dp - D))).astype(jnp.bfloat16)

    w1, w2, w3, w4 = padded["w1"], padded["w2"], padded["w3"], padded["w4"]
    b1, b2, b3, b4 = padded["b1"], padded["b2"], padded["b3"], padded["b4"]

    weight_bytes = (w1.size + w2.size + w3.size + w4.size) * 2
    bias_bytes = (b1.size + b2.size + b3.size + b4.size) * 4
    out_bytes = jnp.dtype(out_dtype).itemsize
    flops = 2 * Bp * (Dp * Hp + Hp * Kp + Kp * Hp + Hp * Dp)
    bytes_accessed = (xp.size * 2 + Bp * Dp * out_bytes
                      + weight_bytes + bias_bytes)
    cost = pl.CostEstimate(flops=flops, transcendentals=0,
                           bytes_accessed=bytes_accessed)

    def vmem_limit(weight_buffers):
        # Real buffer multiplicity: 2x pipelined x/out tiles,
        # weight_buffers x resident weights, plus f32 intermediates
        # (h1, z, h2, y) and headroom for Mosaic internal scratch.
        need = (2 * TM * Dp * 2 + 2 * TM * Dp * out_bytes
                + weight_buffers * (weight_bytes + bias_bytes)
                + TM * (2 * Hp + Kp + Dp) * 4
                + 4 * 1024 * 1024)
        cap = int(0.90 * _vmem_capacity_bytes())
        return int(min(cap, max(need, 16 * 1024 * 1024)))

    grid = (Bp // TM,)

    def call(single_buffer_weights):
        if single_buffer_weights:
            # Constant index_map + Buffered(1): weights DMA'd once and held in
            # a single VMEM buffer (no implicit double-buffering).
            def const(shape):
                return pl.BlockSpec(shape, lambda i: (0, 0),
                                    pipeline_mode=pl.Buffered(1))
            weight_buffers = 1
        else:
            def const(shape):
                return pl.BlockSpec(shape, lambda i: (0, 0))
            weight_buffers = 2

        return pl.pallas_call(
            autoencoder_kernel,
            out_shape=jax.ShapeDtypeStruct((Bp, Dp), out_dtype),
            grid=grid,
            in_specs=[
                pl.BlockSpec((TM, Dp), lambda i: (i, 0)),   # x tiles (pipelined)
                const((Dp, Hp)), const((1, Hp)),            # w1, b1
                const((Hp, Kp)), const((1, Kp)),            # w2, b2
                const((Kp, Hp)), const((1, Hp)),            # w3, b3
                const((Hp, Dp)), const((1, Dp)),            # w4, b4
            ],
            out_specs=pl.BlockSpec((TM, Dp), lambda i: (i, 0)),
            compiler_params=pltpu.CompilerParams(
                dimension_semantics=("parallel",),          # megacore on v7x
                vmem_limit_bytes=vmem_limit(weight_buffers),
            ),
            cost_estimate=cost,
        )(xp, w1, b1, w2, b2, w3, b3, w4, b4)

    # TODO(synk): when weight_bytes exceeds the VMEM budget (very large
    # input_dim, esp. on v7x's 64 MiB VMEM), switch to a K-tiled grid that
    # streams w1/w4 along Hp/Dp into a f32 VMEM accumulator ("arbitrary" axis)
    # instead of keeping all four weights resident.
    try:
        out_pad = jax.block_until_ready(call(single_buffer_weights=True))
    except Exception:
        # Fallback for jax versions where BlockSpec.pipeline_mode /
        # pl.Buffered(1) is not supported on grid-based TPU pallas_call.
        out_pad = call(single_buffer_weights=False)

    return out_pad[:B, :D]


def init_params(key, input_dim, output_dim):
    """Deterministic PyTorch-style init. Weights [in, out]; biases [1, out]."""
    hidden = input_dim // 2
    dims = [(input_dim, hidden),   # encoder.0
            (hidden, output_dim),  # encoder.2
            (output_dim, hidden),  # decoder.0
            (hidden, input_dim)]   # decoder.2
    params = {}
    for i, (fan_in, fan_out) in enumerate(dims, start=1):
        key, kw, kb = jax.random.split(key, 3)
        bound = 1.0 / jnp.sqrt(jnp.float32(fan_in))
        params[f"w{i}"] = jax.random.uniform(
            kw, (fan_in, fan_out), jnp.float32, -bound, bound)
        params[f"b{i}"] = jax.random.uniform(
            kb, (1, fan_out), jnp.float32, -bound, bound)
    return params


def reference_forward(x, p):
    """Plain-JAX f32 reference of the PyTorch forward pass."""
    h1 = jnp.maximum(x @ p["w1"] + p["b1"], 0.0)
    z = h1 @ p["w2"] + p["b2"]
    h2 = jnp.maximum(z @ p["w3"] + p["b3"], 0.0)
    return h2 @ p["w4"] + p["b4"]


if __name__ == "__main__":
    B = 8            # batch
    INPUT_DIM = 32
    OUTPUT_DIM = 8   # bottleneck

    key = jax.random.PRNGKey(0)
    key, kx = jax.random.split(key)
    x = jax.random.normal(kx, (B, INPUT_DIM), jnp.float32)
    params = init_params(key, INPUT_DIM, OUTPUT_DIM)

    # One-time weight padding / bf16 cast (hoisted out of the forward path).
    padded, dims = prepare_params(params)

    out = autoencoder_forward(x, padded, dims)           # bf16 output
    out = jax.block_until_ready(out)

    ref = reference_forward(x, params)
    assert out.shape == (B, INPUT_DIM)
    # bf16 matmul operands + bf16 output (f32 accumulation) -> loosened
    # tolerance vs the f32 reference.
    err = jnp.max(jnp.abs(out.astype(jnp.float32) - ref))
    assert jnp.allclose(out.astype(jnp.float32), ref, atol=5e-2, rtol=5e-2), float(err)

    print("KERNEL_OK")
</pallas_src>

<mosaic_0001>
module attributes {stable_mosaic.version = 11 : i64} {
  func.func @autoencoder_kernel(%arg0: i32, %arg1: memref<16x128xbf16, #tpu.memory_space<vmem>>, %arg2: memref<128x128xbf16, #tpu.memory_space<vmem>>, %arg3: memref<1x128xf32, #tpu.memory_space<vmem>>, %arg4: memref<128x128xbf16, #tpu.memory_space<vmem>>, %arg5: memref<1x128xf32, #tpu.memory_space<vmem>>, %arg6: memref<128x128xbf16, #tpu.memory_space<vmem>>, %arg7: memref<1x128xf32, #tpu.memory_space<vmem>>, %arg8: memref<128x128xbf16, #tpu.memory_space<vmem>>, %arg9: memref<1x128xf32, #tpu.memory_space<vmem>>, %arg10: memref<16x128xbf16, #tpu.memory_space<vmem>>) attributes {dimension_semantics = [#tpu.dimension_semantics<parallel>], iteration_bounds = array<i64: 1>, scalar_prefetch = 0 : i64, scratch_operands = 0 : i64, tpu.core_type = #tpu.core_type<tc>, window_params = [{transform_indices = @transform_0, window_bounds = array<i64: 16, 128>}, {pipeline_mode = #tpu.pipeline_mode<synchronous>, transform_indices = @transform_1, window_bounds = array<i64: 128, 128>}, {pipeline_mode = #tpu.pipeline_mode<synchronous>, transform_indices = @transform_2, window_bounds = array<i64: 1, 128>}, {pipeline_mode = #tpu.pipeline_mode<synchronous>, transform_indices = @transform_3, window_bounds = array<i64: 128, 128>}, {pipeline_mode = #tpu.pipeline_mode<synchronous>, transform_indices = @transform_4, window_bounds = array<i64: 1, 128>}, {pipeline_mode = #tpu.pipeline_mode<synchronous>, transform_indices = @transform_5, window_bounds = array<i64: 128, 128>}, {pipeline_mode = #tpu.pipeline_mode<synchronous>, transform_indices = @transform_6, window_bounds = array<i64: 1, 128>}, {pipeline_mode = #tpu.pipeline_mode<synchronous>, transform_indices = @transform_7, window_bounds = array<i64: 128, 128>}, {pipeline_mode = #tpu.pipeline_mode<synchronous>, transform_indices = @transform_8, window_bounds = array<i64: 1, 128>}, {transform_indices = @transform_9, window_bounds = array<i64: 16, 128>}]} {
    %c0 = arith.constant 0 : index
    %c0_0 = arith.constant 0 : index
    %0 = vector.load %arg1[%c0, %c0_0] : memref<16x128xbf16, #tpu.memory_space<vmem>>, vector<16x128xbf16>
    %c0_1 = arith.constant 0 : index
    %c0_2 = arith.constant 0 : index
    %1 = vector.load %arg2[%c0_1, %c0_2] : memref<128x128xbf16, #tpu.memory_space<vmem>>, vector<128x128xbf16>
    %cst = arith.constant dense<0.000000e+00> : vector<16x128xf32>
    %2 = tpu.matmul %0, %1, %cst {dimension_numbers = #tpu.dot_dimension_numbers<[1], [0], [0], [1], [0, 0, 1, 1], [], []>} : vector<16x128xbf16>, vector<128x128xbf16>, vector<16x128xf32> -> vector<16x128xf32>
    %c0_3 = arith.constant 0 : index
    %c0_4 = arith.constant 0 : index
    %3 = vector.load %arg3[%c0_3, %c0_4] : memref<1x128xf32, #tpu.memory_space<vmem>>, vector<1x128xf32>
    %4 = vector.broadcast %3 : vector<1x128xf32> to vector<16x128xf32>
    %5 = arith.addf %2, %4 : vector<16x128xf32>
    %cst_5 = arith.constant 0.000000e+00 : f32
    %6 = vector.broadcast %cst_5 : f32 to vector<16x128xf32>
    %7 = arith.maximumf %5, %6 : vector<16x128xf32>
    %8 = arith.truncf %7 : vector<16x128xf32> to vector<16x128xbf16>
    %c0_6 = arith.constant 0 : index
    %c0_7 = arith.constant 0 : index
    %9 = vector.load %arg4[%c0_6, %c0_7] : memref<128x128xbf16, #tpu.memory_space<vmem>>, vector<128x128xbf16>
    %cst_8 = arith.constant dense<0.000000e+00> : vector<16x128xf32>
    %10 = tpu.matmul %8, %9, %cst_8 {dimension_numbers = #tpu.dot_dimension_numbers<[1], [0], [0], [1], [0, 0, 1, 1], [], []>} : vector<16x128xbf16>, vector<128x128xbf16>, vector<16x128xf32> -> vector<16x128xf32>
    %c0_9 = arith.constant 0 : index
    %c0_10 = arith.constant 0 : index
    %11 = vector.load %arg5[%c0_9, %c0_10] : memref<1x128xf32, #tpu.memory_space<vmem>>, vector<1x128xf32>
    %12 = vector.broadcast %11 : vector<1x128xf32> to vector<16x128xf32>
    %13 = arith.addf %10, %12 : vector<16x128xf32>
    %14 = arith.truncf %13 : vector<16x128xf32> to vector<16x128xbf16>
    %c0_11 = arith.constant 0 : index
    %c0_12 = arith.constant 0 : index
    %15 = vector.load %arg6[%c0_11, %c0_12] : memref<128x128xbf16, #tpu.memory_space<vmem>>, vector<128x128xbf16>
    %cst_13 = arith.constant dense<0.000000e+00> : vector<16x128xf32>
    %16 = tpu.matmul %14, %15, %cst_13 {dimension_numbers = #tpu.dot_dimension_numbers<[1], [0], [0], [1], [0, 0, 1, 1], [], []>} : vector<16x128xbf16>, vector<128x128xbf16>, vector<16x128xf32> -> vector<16x128xf32>
    %c0_14 = arith.constant 0 : index
    %c0_15 = arith.constant 0 : index
    %17 = vector.load %arg7[%c0_14, %c0_15] : memref<1x128xf32, #tpu.memory_space<vmem>>, vector<1x128xf32>
    %18 = vector.broadcast %17 : vector<1x128xf32> to vector<16x128xf32>
    %19 = arith.addf %16, %18 : vector<16x128xf32>
    %cst_16 = arith.constant 0.000000e+00 : f32
    %20 = vector.broadcast %cst_16 : f32 to vector<16x128xf32>
    %21 = arith.maximumf %19, %20 : vector<16x128xf32>
    %22 = arith.truncf %21 : vector<16x128xf32> to vector<16x128xbf16>
    %c0_17 = arith.constant 0 : index
    %c0_18 = arith.constant 0 : index
    %23 = vector.load %arg8[%c0_17, %c0_18] : memref<128x128xbf16, #tpu.memory_space<vmem>>, vector<128x128xbf16>
    %cst_19 = arith.constant dense<0.000000e+00> : vector<16x128xf32>
    %24 = tpu.matmul %22, %23, %cst_19 {dimension_numbers = #tpu.dot_dimension_numbers<[1], [0], [0], [1], [0, 0, 1, 1], [], []>} : vector<16x128xbf16>, vector<128x128xbf16>, vector<16x128xf32> -> vector<16x128xf32>
    %c0_20 = arith.constant 0 : index
    %c0_21 = arith.constant 0 : index
    %25 = vector.load %arg9[%c0_20, %c0_21] : memref<1x128xf32, #tpu.memory_space<vmem>>, vector<1x128xf32>
    %26 = vector.broadcast %25 : vector<1x128xf32> to vector<16x128xf32>
    %27 = arith.addf %24, %26 : vector<16x128xf32>
    %28 = arith.truncf %27 : vector<16x128xf32> to vector<16x128xbf16>
    %c0_22 = arith.constant 0 : index
    %c0_23 = arith.constant 0 : index
    %29 = vector.load %arg10[%c0_22, %c0_23] : memref<16x128xbf16, #tpu.memory_space<vmem>>, vector<16x128xbf16>
    tpu.vector_store %arg10[%c0_22, %c0_23], %28 {strides = array<i32>} : memref<16x128xbf16, #tpu.memory_space<vmem>>, vector<16x128xbf16>,
    return
  }
  func.func @transform_0(%arg0: i32) -> (i32, i32) {
    %c0_i32 = arith.constant 0 : i32
    %c0_i32_0 = arith.constant 0 : i32
    return %arg0, %c0_i32 : i32, i32
  }
  func.func @transform_1(%arg0: i32) -> (i32, i32) {
    %c0_i32 = arith.constant 0 : i32
    %c0_i32_0 = arith.constant 0 : i32
    %c0_i32_1 = arith.constant 0 : i32
    return %c0_i32, %c0_i32_0 : i32, i32
  }
  func.func @transform_2(%arg0: i32) -> (i32, i32) {
    %c0_i32 = arith.constant 0 : i32
    %c0_i32_0 = arith.constant 0 : i32
    %c0_i32_1 = arith.constant 0 : i32
    return %c0_i32, %c0_i32_0 : i32, i32
  }
  func.func @transform_3(%arg0: i32) -> (i32, i32) {
    %c0_i32 = arith.constant 0 : i32
    %c0_i32_0 = arith.constant 0 : i32
    %c0_i32_1 = arith.constant 0 : i32
    return %c0_i32, %c0_i32_0 : i32, i32
  }
  func.func @transform_4(%arg0: i32) -> (i32, i32) {
    %c0_i32 = arith.constant 0 : i32
    %c0_i32_0 = arith.constant 0 : i32
    %c0_i32_1 = arith.constant 0 : i32
    return %c0_i32, %c0_i32_0 : i32, i32
  }
  func.func @transform_5(%arg0: i32) -> (i32, i32) {
    %c0_i32 = arith.constant 0 : i32
    %c0_i32_0 = arith.constant 0 : i32
    %c0_i32_1 = arith.constant 0 : i32
    return %c0_i32, %c0_i32_0 : i32, i32
  }
  func.func @transform_6(%arg0: i32) -> (i32, i32) {
    %c0_i32 = arith.constant 0 : i32
    %c0_i32_0 = arith.constant 0 : i32
    %c0_i32_1 = arith.constant 0 : i32
    return %c0_i32, %c0_i32_0 : i32, i32
  }
  func.func @transform_7(%arg0: i32) -> (i32, i32) {
    %c0_i32 = arith.constant 0 : i32
    %c0_i32_0 = arith.constant 0 : i32
    %c0_i32_1 = arith.constant 0 : i32
    return %c0_i32, %c0_i32_0 : i32, i32
  }
  func.func @transform_8(%arg0: i32) -> (i32, i32) {
    %c0_i32 = arith.constant 0 : i32
    %c0_i32_0 = arith.constant 0 : i32
    %c0_i32_1 = arith.constant 0 : i32
    return %c0_i32, %c0_i32_0 : i32, i32
  }
  func.func @transform_9(%arg0: i32) -> (i32, i32) {
    %c0_i32 = arith.constant 0 : i32
    %c0_i32_0 = arith.constant 0 : i32
    return %arg0, %c0_i32 : i32, i32
  }
}

module attributes {stable_mosaic.version = 11 : i64} {
  func.func @autoencoder_kernel(%arg0: i32, %arg1: memref<16x128xbf16, #tpu.memory_space<vmem>>, %arg2: memref<128x128xbf16, #tpu.memory_space<vmem>>, %arg3: memref<1x128xf32, #tpu.memory_space<vmem>>, %arg4: memref<128x128xbf16, #tpu.memory_space<vmem>>, %arg5: memref<1x128xf32, #tpu.memory_space<vmem>>, %arg6: memref<128x128xbf16, #tpu.memory_space<vmem>>, %arg7: memref<1x128xf32, #tpu.memory_space<vmem>>, %arg8: memref<128x128xbf16, #tpu.memory_space<vmem>>, %arg9: memref<1x128xf32, #tpu.memory_space<vmem>>, %arg10: memref<16x128xbf16, #tpu.memory_space<vmem>>) attributes {dimension_semantics = [#tpu.dimension_semantics<parallel>], iteration_bounds = array<i64: 1>, scalar_prefetch = 0 : i64, scratch_operands = 0 : i64, tpu.core_type = #tpu.core_type<tc>, window_params = [{transform_indices = @transform_0, window_bounds = array<i64: 16, 128>}, {pipeline_mode = #tpu.pipeline_mode<synchronous>, transform_indices = @transform_1, window_bounds = array<i64: 128, 128>}, {pipeline_mode = #tpu.pipeline_mode<synchronous>, transform_indices = @transform_2, window_bounds = array<i64: 1, 128>}, {pipeline_mode = #tpu.pipeline_mode<synchronous>, transform_indices = @transform_3, window_bounds = array<i64: 128, 128>}, {pipeline_mode = #tpu.pipeline_mode<synchronous>, transform_indices = @transform_4, window_bounds = array<i64: 1, 128>}, {pipeline_mode = #tpu.pipeline_mode<synchronous>, transform_indices = @transform_5, window_bounds = array<i64: 128, 128>}, {pipeline_mode = #tpu.pipeline_mode<synchronous>, transform_indices = @transform_6, window_bounds = array<i64: 1, 128>}, {pipeline_mode = #tpu.pipeline_mode<synchronous>, transform_indices = @transform_7, window_bounds = array<i64: 128, 128>}, {pipeline_mode = #tpu.pipeline_mode<synchronous>, transform_indices = @transform_8, window_bounds = array<i64: 1, 128>}, {transform_indices = @transform_9, window_bounds = array<i64: 16, 128>}]} {
    %c0 = arith.constant 0 : index
    %c0_0 = arith.constant 0 : index
    %0 = vector.load %arg1[%c0, %c0_0] : memref<16x128xbf16, #tpu.memory_space<vmem>>, vector<16x128xbf16>
    %c0_1 = arith.constant 0 : index
    %c0_2 = arith.constant 0 : index
    %1 = vector.load %arg2[%c0_1, %c0_2] : memref<128x128xbf16, #tpu.memory_space<vmem>>, vector<128x128xbf16>
    %cst = arith.constant dense<0.000000e+00> : vector<16x128xf32>
    %2 = tpu.matmul %0, %1, %cst {dimension_numbers = #tpu.dot_dimension_numbers<[1], [0], [0], [1], [0, 0, 1, 1], [], []>} : vector<16x128xbf16>, vector<128x128xbf16>, vector<16x128xf32> -> vector<16x128xf32>
    %c0_3 = arith.constant 0 : index
    %c0_4 = arith.constant 0 : index
    %3 = vector.load %arg3[%c0_3, %c0_4] : memref<1x128xf32, #tpu.memory_space<vmem>>, vector<1x128xf32>
    %4 = vector.broadcast %3 : vector<1x128xf32> to vector<16x128xf32>
    %5 = arith.addf %2, %4 : vector<16x128xf32>
    %cst_5 = arith.constant 0.000000e+00 : f32
    %6 = vector.broadcast %cst_5 : f32 to vector<16x128xf32>
    %7 = arith.maximumf %5, %6 : vector<16x128xf32>
    %8 = arith.truncf %7 : vector<16x128xf32> to vector<16x128xbf16>
    %c0_6 = arith.constant 0 : index
    %c0_7 = arith.constant 0 : index
    %9 = vector.load %arg4[%c0_6, %c0_7] : memref<128x128xbf16, #tpu.memory_space<vmem>>, vector<128x128xbf16>
    %cst_8 = arith.constant dense<0.000000e+00> : vector<16x128xf32>
    %10 = tpu.matmul %8, %9, %cst_8 {dimension_numbers = #tpu.dot_dimension_numbers<[1], [0], [0], [1], [0, 0, 1, 1], [], []>} : vector<16x128xbf16>, vector<128x128xbf16>, vector<16x128xf32> -> vector<16x128xf32>
    %c0_9 = arith.constant 0 : index
    %c0_10 = arith.constant 0 : index
    %11 = vector.load %arg5[%c0_9, %c0_10] : memref<1x128xf32, #tpu.memory_space<vmem>>, vector<1x128xf32>
    %12 = vector.broadcast %11 : vector<1x128xf32> to vector<16x128xf32>
    %13 = arith.addf %10, %12 : vector<16x128xf32>
    %14 = arith.truncf %13 : vector<16x128xf32> to vector<16x128xbf16>
    %c0_11 = arith.constant 0 : index
    %c0_12 = arith.constant 0 : index
    %15 = vector.load %arg6[%c0_11, %c0_12] : memref<128x128xbf16, #tpu.memory_space<vmem>>, vector<128x128xbf16>
    %cst_13 = arith.constant dense<0.000000e+00> : vector<16x128xf32>
    %16 = tpu.matmul %14, %15, %cst_13 {dimension_numbers = #tpu.dot_dimension_numbers<[1], [0], [0], [1], [0, 0, 1, 1], [], []>} : vector<16x128xbf16>, vector<128x128xbf16>, vector<16x128xf32> -> vector<16x128xf32>
    %c0_14 = arith.constant 0 : index
    %c0_15 = arith.constant 0 : index
    %17 = vector.load %arg7[%c0_14, %c0_15] : memref<1x128xf32, #tpu.memory_space<vmem>>, vector<1x128xf32>
    %18 = vector.broadcast %17 : vector<1x128xf32> to vector<16x128xf32>
    %19 = arith.addf %16, %18 : vector<16x128xf32>
    %cst_16 = arith.constant 0.000000e+00 : f32
    %20 = vector.broadcast %cst_16 : f32 to vector<16x128xf32>
    %21 = arith.maximumf %19, %20 : vector<16x128xf32>
    %22 = arith.truncf %21 : vector<16x128xf32> to vector<16x128xbf16>
    %c0_17 = arith.constant 0 : index
    %c0_18 = arith.constant 0 : index
    %23 = vector.load %arg8[%c0_17, %c0_18] : memref<128x128xbf16, #tpu.memory_space<vmem>>, vector<128x128xbf16>
    %cst_19 = arith.constant dense<0.000000e+00> : vector<16x128xf32>
    %24 = tpu.matmul %22, %23, %cst_19 {dimension_numbers = #tpu.dot_dimension_numbers<[1], [0], [0], [1], [0, 0, 1, 1], [], []>} : vector<16x128xbf16>, vector<128x128xbf16>, vector<16x128xf32> -> vector<16x128xf32>
    %c0_20 = arith.constant 0 : index
    %c0_21 = arith.constant 0 : index
    %25 = vector.load %arg9[%c0_20, %c0_21] : memref<1x128xf32, #tpu.memory_space<vmem>>, vector<1x128xf32>
    %26 = vector.broadcast %25 : vector<1x128xf32> to vector<16x128xf32>
    %27 = arith.addf %24, %26 : vector<16x128xf32>
    %28 = arith.truncf %27 : vector<16x128xf32> to vector<16x128xbf16>
    %c0_22 = arith.constant 0 : index
    %c0_23 = arith.constant 0 : index
    %29 = vector.load %arg10[%c0_22, %c0_23] : memref<16x128xbf16, #tpu.memory_space<vmem>>, vector<16x128xbf16>
    tpu.vector_store %arg10[%c0_22, %c0_23], %28 {strides = array<i32>} : memref<16x128xbf16, #tpu.memory_space<vmem>>, vector<16x128xbf16>,
    return
  }
  func.func @transform_0(%arg0: i32) -> (i32, i32) {
    %c0_i32 = arith.constant 0 : i32
    %c0_i32_0 = arith.constant 0 : i32
    return %arg0, %c0_i32 : i32, i32
  }
  func.func @transform_1(%arg0: i32) -> (i32, i32) {
    %c0_i32 = arith.constant 0 : i32
    %c0_i32_0 = arith.constant 0 : i32
    %c0_i32_1 = arith.constant 0 : i32
    return %c0_i32, %c0_i32_0 : i32, i32
  }
  func.func @transform_2(%arg0: i32) -> (i32, i32) {
    %c0_i32 = arith.constant 0 : i32
    %c0_i32_0 = arith.constant 0 : i32
    %c0_i32_1 = arith.constant 0 : i32
    return %c0_i32, %c0_i32_0 : i32, i32
  }
  func.func @transform_3(%arg0: i32) -> (i32, i32) {
    %c0_i32 = arith.constant 0 : i32
    %c0_i32_0 = arith.constant 0 : i32
    %c0_i32_1 = arith.constant 0 : i32
    return %c0_i32, %c0_i32_0 : i32, i32
  }
  func.func @transform_4(%arg0: i32) -> (i32, i32) {
    %c0_i32 = arith.constant 0 : i32
    %c0_i32_0 = arith.constant 0 : i32
    %c0_i32_1 = arith.constant 0 : i32
    return %c0_i32, %c0_i32_0 : i32, i32
  }
  func.func @transform_5(%arg0: i32) -> (i32, i32) {
    %c0_i32 = arith.constant 0 : i32
    %c0_i32_0 = arith.constant 0 : i32
    %c0_i32_1 = arith.constant 0 : i32
    return %c0_i32, %c0_i32_0 : i32, i32
  }
  func.func @transform_6(%arg0: i32) -> (i32, i32) {
    %c0_i32 = arith.constant 0 : i32
    %c0_i32_0 = arith.constant 0 : i32
    %c0_i32_1 = arith.constant 0 : i32
    return %c0_i32, %c0_i32_0 : i32, i32
  }
  func.func @transform_7(%arg0: i32) -> (i32, i32) {
    %c0_i32 = arith.constant 0 : i32
    %c0_i32_0 = arith.constant 0 : i32
    %c0_i32_1 = arith.constant 0 : i32
    return %c0_i32, %c0_i32_0 : i32, i32
  }
  func.func @transform_8(%arg0: i32) -> (i32, i32) {
    %c0_i32 = arith.constant 0 : i32
    %c0_i32_0 = arith.constant 0 : i32
    %c0_i32_1 = arith.constant 0 : i32
    return %c0_i32, %c0_i32_0 : i32, i32
  }
  func.func @transform_9(%arg0: i32) -> (i32, i32) {
    %c0_i32 = arith.constant 0 : i32
    %c0_i32_0 = arith.constant 0 : i32
    return %arg0, %c0_i32 : i32, i32
  }
}

</mosaic_0001>

<llo_original>
// kernel: tpu_custom_call.1
$region0: #{tpu_custom_call.1}
  #allocation0 [shape = 'u32[]', space=smem, size = 0x4, offset = 0x4, fixed_abs, tag = 'smem constant byte address 0x4 - core index']
  #allocation1 [shape = 'u32[144,128]{1,0:T(1,128)}', space=vmem, size = 0x12000, scoped, tag = 'internal scratch']
  %s0 = inlined_call_operand.hbm [shape: bf16[16,128], index: 0, kind: input, shape index: {}]
  %s1 = inlined_call_operand.hbm [shape: bf16[128,128], index: 1, kind: input, shape index: {}]
  %s2 = inlined_call_operand.vmem [shape: f32[1,128], index: 2, kind: input, shape index: {}]
  %s3 = inlined_call_operand.hbm [shape: bf16[128,128], index: 3, kind: input, shape index: {}]
  %s4 = inlined_call_operand.vmem [shape: f32[1,128], index: 4, kind: input, shape index: {}]
  %s5 = inlined_call_operand.hbm [shape: bf16[128,128], index: 5, kind: input, shape index: {}]
  %s6 = inlined_call_operand.vmem [shape: f32[1,128], index: 6, kind: input, shape index: {}]
  %s7 = inlined_call_operand.hbm [shape: bf16[128,128], index: 7, kind: input, shape index: {}]
  %s8 = inlined_call_operand.vmem [shape: f32[1,128], index: 8, kind: input, shape index: {}]
  %s9 = inlined_call_operand.hbm [shape: bf16[16,128], index: 9, kind: output, shape index: {}]
  %s10 = sld [smem:[#allocation0]]
  $region66: #{tpu_custom_call.1} parent=0
    _
  %s12 = ssub.s32 1, %s10
  %s13 = scalar_select 0, %s12, %s10
  $region1: #{tpu_custom_call.1} parent=0
    #allocation2 [shape = 'u8[4096]{0}', space=vmem, size = 0x1000, scoped, tag = 'input window, operand 0, single buffered']
    #allocation3 [shape = 's32[1]{0}', space=sflag, size = 0x4, scoped, tag = 'scoped memory for tpu_custom_call.1']
    #allocation4 [shape = 's32[1]{0}', space=sflag, size = 0x4, scoped, tag = 'scoped memory for tpu_custom_call.1']
    #allocation5 [shape = 'u8[32768]{0}', space=vmem, size = 0x8000, scoped, tag = 'input window, operand 1, single buffered']
    #allocation6 [shape = 's32[1]{0}', space=sflag, size = 0x4, scoped, tag = 'scoped memory for tpu_custom_call.1']
    #allocation7 [shape = 'u8[32768]{0}', space=vmem, size = 0x8000, scoped, tag = 'input window, operand 3, single buffered']
    #allocation8 [shape = 'u8[32768]{0}', space=vmem, size = 0x8000, scoped, tag = 'input window, operand 5, single buffered']
    #allocation9 [shape = 's32[1]{0}', space=sflag, size = 0x4, scoped, tag = 'scoped memory for tpu_custom_call.1']
    #allocation10 [shape = 'u8[32768]{0}', space=vmem, size = 0x8000, scoped, tag = 'input window, operand 7, single buffered']
    #allocation11 [shape = 'u8[4096]{0}', space=vmem, size = 0x1000, scoped, tag = 'output window, operand 0, single buffered']
    %14 = vsyncpa [#allocation3], 0
    %15 = vsyncpa [#allocation6], 0
    %16 = vsyncpa [#allocation9], 0
    %17 = vsyncpa [#allocation4], 0
    // Predicated region
    $region2: #{tpu_custom_call.1} parent=1 // pred_check
      _
    $region3: #{tpu_custom_call.1} parent=1 // pred_check_branch
      %19 = sbr.rel (0) target = $region5
    $region4: #{tpu_custom_call.1} parent=1 // pred_region
      %s21 = ssub.s32 128, 128
      %22 = vsyncadd [#allocation3], %s21
      %s23 = sshll.u32 [#allocation2], 4
      %s24 = int_to_ptr.vmem [resolvable:$true] %s23
      %29 = dma.hbm_to_vmem [thread:$0]  %s0, 128, %s24, [#allocation3], 64, 64, 4
    $region5: #{tpu_custom_call.1} parent=1 // pred_fallthru
      _
    // Predicated region
    $region6: #{tpu_custom_call.1} parent=1 // pred_check
      _
    $region7: #{tpu_custom_call.1} parent=1 // pred_check_branch
      %31 = sbr.rel (0) target = $region9
    $region8: #{tpu_custom_call.1} parent=1 // pred_region
      %s33 = ssub.s32 1024, 1024
      %34 = vsyncadd [#allocation6], %s33
      %s35 = sshll.u32 [#allocation5], 4
      %s36 = int_to_ptr.vmem [resolvable:$true] %s35
      %41 = dma.hbm_to_vmem [thread:$0]  %s1, 1024, %s36, [#allocation6], 64, 64, 4
    $region9: #{tpu_custom_call.1} parent=1 // pred_fallthru
      _
    // Predicated region
    $region10: #{tpu_custom_call.1} parent=1 // pred_check
      _
    $region11: #{tpu_custom_call.1} parent=1 // pred_check_branch
      %43 = sbr.rel (0) target = $region13
    $region12: #{tpu_custom_call.1} parent=1 // pred_region
      _
    $region13: #{tpu_custom_call.1} parent=1 // pred_fallthru
      _
    // Predicated region
    $region14: #{tpu_custom_call.1} parent=1 // pred_check
      _
    $region15: #{tpu_custom_call.1} parent=1 // pred_check_branch
      %45 = sbr.rel (0) target = $region17
    $region16: #{tpu_custom_call.1} parent=1 // pred_region
      %s47 = ssub.s32 1024, 1024
      %48 = vsyncadd [#allocation6], %s47
      %s49 = sshll.u32 [#allocation7], 4
      %s50 = int_to_ptr.vmem [resolvable:$true] %s49
      %55 = dma.hbm_to_vmem [thread:$0]  %s3, 1024, %s50, [#allocation6], 64, 64, 4
    $region17: #{tpu_custom_call.1} parent=1 // pred_fallthru
      _
    // Predicated region
    $region18: #{tpu_custom_call.1} parent=1 // pred_check
      _
    $region19: #{tpu_custom_call.1} parent=1 // pred_check_branch
      %57 = sbr.rel (0) target = $region21
    $region20: #{tpu_custom_call.1} parent=1 // pred_region
      _
    $region21: #{tpu_custom_call.1} parent=1 // pred_fallthru
      _
    // Predicated region
    $region22: #{tpu_custom_call.1} parent=1 // pred_check
      _
    $region23: #{tpu_custom_call.1} parent=1 // pred_check_branch
      %59 = sbr.rel (0) target = $region25
    $region24: #{tpu_custom_call.1} parent=1 // pred_region
      %s61 = ssub.s32 1024, 1024
      %62 = vsyncadd [#allocation9], %s61
      %s63 = sshll.u32 [#allocation8], 4
      %s64 = int_to_ptr.vmem [resolvable:$true] %s63
      %69 = dma.hbm_to_vmem [thread:$0]  %s5, 1024, %s64, [#allocation9], 64, 64, 4
    $region25: #{tpu_custom_call.1} parent=1 // pred_fallthru
      _
    // Predicated region
    $region26: #{tpu_custom_call.1} parent=1 // pred_check
      _
    $region27: #{tpu_custom_call.1} parent=1 // pred_check_branch
      %71 = sbr.rel (0) target = $region29
    $region28: #{tpu_custom_call.1} parent=1 // pred_region
      _
    $region29: #{tpu_custom_call.1} parent=1 // pred_fallthru
      _
    // Predicated region
    $region30: #{tpu_custom_call.1} parent=1 // pred_check
      _
    $region31: #{tpu_custom_call.1} parent=1 // pred_check_branch
      %73 = sbr.rel (0) target = $region33
    $region32: #{tpu_custom_call.1} parent=1 // pred_region
      %s75 = ssub.s32 1024, 1024
      %76 = vsyncadd [#allocation9], %s75
      %s77 = sshll.u32 [#allocation10], 4
      %s78 = int_to_ptr.vmem [resolvable:$true] %s77
      %83 = dma.hbm_to_vmem [thread:$0]  %s7, 1024, %s78, [#allocation9], 64, 64, 4
    $region33: #{tpu_custom_call.1} parent=1 // pred_fallthru
      _
    // Predicated region
    $region34: #{tpu_custom_call.1} parent=1 // pred_check
      _
    $region35: #{tpu_custom_call.1} parent=1 // pred_check_branch
      %85 = sbr.rel (0) target = $region37
    $region36: #{tpu_custom_call.1} parent=1 // pred_region
      _
    $region37: #{tpu_custom_call.1} parent=1 // pred_fallthru
      _
    // Predicated region
    $region38: #{tpu_custom_call.1} parent=1 // pred_check
      _
    $region39: #{tpu_custom_call.1} parent=1 // pred_check_branch
      %87 = sbr.rel (0) target = $region41
    $region40: #{tpu_custom_call.1} parent=1 // pred_region
      %88 = dma.done [#allocation3], 128
    $region41: #{tpu_custom_call.1} parent=1 // pred_fallthru
      _
    // Predicated region
    $region42: #{tpu_custom_call.1} parent=1 // pred_check
      _
    $region43: #{tpu_custom_call.1} parent=1 // pred_check_branch
      %90 = sbr.rel (0) target = $region45
    $region44: #{tpu_custom_call.1} parent=1 // pred_region
      %91 = dma.done [#allocation6], 1024
    $region45: #{tpu_custom_call.1} parent=1 // pred_fallthru
      _
    // Predicated region
    $region46: #{tpu_custom_call.1} parent=1 // pred_check
      _
    $region47: #{tpu_custom_call.1} parent=1 // pred_check_branch
      %93 = sbr.rel (0) target = $region49
    $region48: #{tpu_custom_call.1} parent=1 // pred_region
      %94 = dma.done [#allocation6], 1024
    $region49: #{tpu_custom_call.1} parent=1 // pred_fallthru
      _
    // Predicated region
    $region50: #{tpu_custom_call.1} parent=1 // pred_check
      _
    $region51: #{tpu_custom_call.1} parent=1 // pred_check_branch
      %96 = sbr.rel (0) target = $region53
    $region52: #{tpu_custom_call.1} parent=1 // pred_region
      %97 = dma.done [#allocation9], 1024
    $region53: #{tpu_custom_call.1} parent=1 // pred_fallthru
      _
    // Predicated region
    $region54: #{tpu_custom_call.1} parent=1 // pred_check
      _
    $region55: #{tpu_custom_call.1} parent=1 // pred_check_branch
      %99 = sbr.rel (0) target = $region57
    $region56: #{tpu_custom_call.1} parent=1 // pred_region
      %100 = dma.done [#allocation9], 1024
    $region57: #{tpu_custom_call.1} parent=1 // pred_fallthru
      _
    %v102 = vld [vmem:[#allocation2] sm:$0xf]
    %v103 = vld [vmem:[#allocation2 + $0x4] sm:$0xf]
    %v104 = vld [vmem:[#allocation5] sm:$0xf]
    %v105 = vld [vmem:[#allocation5 + $0x4] sm:$0xf]
    %v106 = vld [vmem:[#allocation5 + $0x8] sm:$0xf]
    %v107 = vld [vmem:[#allocation5 + $0xc] sm:$0xf]
    %v108 = vld [vmem:[#allocation5 + $0x10] sm:$0xf]
    %v109 = vld [vmem:[#allocation5 + $0x14] sm:$0xf]
    %v110 = vld [vmem:[#allocation5 + $0x18] sm:$0xf]
    %v111 = vld [vmem:[#allocation5 + $0x1c] sm:$0xf]
    %v112 = vld [vmem:[#allocation5 + $0x20] sm:$0xf]
    %v113 = vld [vmem:[#allocation5 + $0x24] sm:$0xf]
    %v114 = vld [vmem:[#allocation5 + $0x28] sm:$0xf]
    %v115 = vld [vmem:[#allocation5 + $0x2c] sm:$0xf]
    %v116 = vld [vmem:[#allocation5 + $0x30] sm:$0xf]
    %v117 = vld [vmem:[#allocation5 + $0x34] sm:$0xf]
    %v118 = vld [vmem:[#allocation5 + $0x38] sm:$0xf]
    %v119 = vld [vmem:[#allocation5 + $0x3c] sm:$0xf]
    %v120 = vld [vmem:[%s2] sm:$0x1]
    %v122 = vlaneseq
    %v123 = vshrl.u32 %v122, 7
    %v124 = vsub.s32 0, %v123
    %v125 = vrot.slane %v120, %v124
    %v129 = vunpack.c.l.b16 %v102
    %v130 = vunpack.c.l.b16 %v103
    %v131 = vpack.c.b16 %v130, %v129
    %v149 = vunpack.c.l.b16 %v104
    %v150 = vunpack.c.l.b16 %v105
    %v151 = vunpack.c.l.b16 %v106
    %v152 = vunpack.c.l.b16 %v107
    %v153 = vunpack.c.l.b16 %v108
    %v154 = vunpack.c.l.b16 %v109
    %v155 = vunpack.c.l.b16 %v110
    %v156 = vunpack.c.l.b16 %v111
    %v157 = vunpack.c.l.b16 %v112
    %v158 = vunpack.c.l.b16 %v113
    %v159 = vunpack.c.l.b16 %v114
    %v160 = vunpack.c.l.b16 %v115
    %v161 = vunpack.c.l.b16 %v116
    %v162 = vunpack.c.l.b16 %v117
    %v163 = vunpack.c.l.b16 %v118
    %v164 = vunpack.c.l.b16 %v119
    %v165 = vpack.c.b16 %v150, %v149
    %v166 = vpack.c.b16 %v152, %v151
    %v167 = vpack.c.b16 %v154, %v153
    %v168 = vpack.c.b16 %v156, %v155
    %v169 = vpack.c.b16 %v158, %v157
    %v170 = vpack.c.b16 %v160, %v159
    %v171 = vpack.c.b16 %v162, %v161
    %v172 = vpack.c.b16 %v164, %v163
    %181 = vmatprep.subr.bf16.mxu0 0
    %182 = vmatpush1.bf16.msra.mxu0 %v165
    %183 = vmatprep.subr.bf16.mxu0 0
    %184 = vmatpush1.bf16.msra.mxu0 %v166
    %185 = vmatprep.subr.bf16.mxu0 0
    %186 = vmatpush1.bf16.msra.mxu0 %v167
    %187 = vmatprep.subr.bf16.mxu0 0
    %188 = vmatpush1.bf16.msra.mxu0 %v168
    %189 = vmatprep.subr.bf16.mxu0 0
    %190 = vmatpush1.bf16.msra.mxu0 %v169
    %191 = vmatprep.subr.bf16.mxu0 0
    %192 = vmatpush1.bf16.msra.mxu0 %v170
    %193 = vmatprep.subr.bf16.mxu0 0
    %194 = vmatpush1.bf16.msra.mxu0 %v171
    %195 = vmatprep.subr.bf16.mxu0 0
    %196 = vmatpush1.bf16.msra.mxu0 %v172
    %197 = vmatprep.subr.bf16.mxu0 0
    %198 = vmatpush1.bf16.msra.mxu0 0
    %199 = vmatprep.subr.bf16.mxu0 0
    %200 = vmatpush1.bf16.msra.mxu0 0
    %201 = vmatprep.subr.bf16.mxu0 0
    %202 = vmatpush1.bf16.msra.mxu0 0
    %203 = vmatprep.subr.bf16.mxu0 0
    %204 = vmatpush1.bf16.msra.mxu0 0
    %205 = vmatprep.subr.bf16.mxu0 0
    %206 = vmatpush1.bf16.msra.mxu0 0
    %207 = vmatprep.subr.bf16.mxu0 0
    %208 = vmatpush1.bf16.msra.mxu0 0
    %209 = vmatprep.subr.bf16.mxu0 0
    %210 = vmatpush1.bf16.msra.mxu0 0
    %211 = vmatprep.subr.bf16.mxu0 0
    %212 = vmatpush1.bf16.msra.mxu0 0
    %213 = vmatprep.mubr.bf16.mxu0 0
    %214 = vmatmul.mubr.bf16.gmra.mrb[0].mxu0 %v131
    %v215 = vpop.f32.mrb[0].mxu0
    %v216 = vadd.f32 %v125, %v215
    %v217 = vpop.f32.mrb[0].mxu0
    %v218 = vpop.f32.mrb[0].mxu0
    %v219 = vadd.f32 %v125, %v218
    %v220 = vpop.f32.mrb[0].mxu0
    %221 = vdwg.mxu0
    %v222 = vmax.f32 %v216, 0.0
    %v223 = vmax.f32 %v219, 0.0
    %v224 = vpack.c.bf16 %v223, %v222
    %v225 = vld [vmem:[#allocation7] sm:$0xf]
    %v226 = vld [vmem:[#allocation7 + $0x4] sm:$0xf]
    %v227 = vld [vmem:[#allocation7 + $0x8] sm:$0xf]
    %v228 = vld [vmem:[#allocation7 + $0xc] sm:$0xf]
    %v229 = vld [vmem:[#allocation7 + $0x10] sm:$0xf]
    %v230 = vld [vmem:[#allocation7 + $0x14] sm:$0xf]
    %v231 = vld [vmem:[#allocation7 + $0x18] sm:$0xf]
    %v232 = vld [vmem:[#allocation7 + $0x1c] sm:$0xf]
    %v233 = vld [vmem:[#allocation7 + $0x20] sm:$0xf]
    %v234 = vld [vmem:[#allocation7 + $0x24] sm:$0xf]
    %v235 = vld [vmem:[#allocation7 + $0x28] sm:$0xf]
    %v236 = vld [vmem:[#allocation7 + $0x2c] sm:$0xf]
    %v237 = vld [vmem:[#allocation7 + $0x30] sm:$0xf]
    %v238 = vld [vmem:[#allocation7 + $0x34] sm:$0xf]
    %v239 = vld [vmem:[#allocation7 + $0x38] sm:$0xf]
    %v240 = vld [vmem:[#allocation7 + $0x3c] sm:$0xf]
    %v241 = vld [vmem:[%s4] sm:$0x1]
    %v243 = vlaneseq
    %v244 = vshrl.u32 %v243, 7
    %v245 = vsub.s32 0, %v244
    %v246 = vrot.slane %v241, %v245
    %v264 = vunpack.c.l.b16 %v225
    %v265 = vunpack.c.l.b16 %v226
    %v266 = vunpack.c.l.b16 %v227
    %v267 = vunpack.c.l.b16 %v228
    %v268 = vunpack.c.l.b16 %v229
    %v269 = vunpack.c.l.b16 %v230
    %v270 = vunpack.c.l.b16 %v231
    %v271 = vunpack.c.l.b16 %v232
    %v272 = vunpack.c.l.b16 %v233
    %v273 = vunpack.c.l.b16 %v234
    %v274 = vunpack.c.l.b16 %v235
    %v275 = vunpack.c.l.b16 %v236
    %v276 = vunpack.c.l.b16 %v237
    %v277 = vunpack.c.l.b16 %v238
    %v278 = vunpack.c.l.b16 %v239
    %v279 = vunpack.c.l.b16 %v240
    %v280 = vpack.c.b16 %v265, %v264
    %v281 = vpack.c.b16 %v267, %v266
    %v282 = vpack.c.b16 %v269, %v268
    %v283 = vpack.c.b16 %v271, %v270
    %v284 = vpack.c.b16 %v273, %v272
    %v285 = vpack.c.b16 %v275, %v274
    %v286 = vpack.c.b16 %v277, %v276
    %v287 = vpack.c.b16 %v279, %v278
    %296 = vmatprep.subr.bf16.mxu0 0
    %297 = vmatpush1.bf16.msra.mxu0 %v280
    %298 = vmatprep.subr.bf16.mxu0 0
    %299 = vmatpush1.bf16.msra.mxu0 %v281
    %300 = vmatprep.subr.bf16.mxu0 0
    %301 = vmatpush1.bf16.msra.mxu0 %v282
    %302 = vmatprep.subr.bf16.mxu0 0
    %303 = vmatpush1.bf16.msra.mxu0 %v283
    %304 = vmatprep.subr.bf16.mxu0 0
    %305 = vmatpush1.bf16.msra.mxu0 %v284
    %306 = vmatprep.subr.bf16.mxu0 0
    %307 = vmatpush1.bf16.msra.mxu0 %v285
    %308 = vmatprep.subr.bf16.mxu0 0
    %309 = vmatpush1.bf16.msra.mxu0 %v286
    %310 = vmatprep.subr.bf16.mxu0 0
    %311 = vmatpush1.bf16.msra.mxu0 %v287
    %312 = vmatprep.subr.bf16.mxu0 0
    %313 = vmatpush1.bf16.msra.mxu0 0
    %314 = vmatprep.subr.bf16.mxu0 0
    %315 = vmatpush1.bf16.msra.mxu0 0
    %316 = vmatprep.subr.bf16.mxu0 0
    %317 = vmatpush1.bf16.msra.mxu0 0
    %318 = vmatprep.subr.bf16.mxu0 0
    %319 = vmatpush1.bf16.msra.mxu0 0
    %320 = vmatprep.subr.bf16.mxu0 0
    %321 = vmatpush1.bf16.msra.mxu0 0
    %322 = vmatprep.subr.bf16.mxu0 0
    %323 = vmatpush1.bf16.msra.mxu0 0
    %324 = vmatprep.subr.bf16.mxu0 0
    %325 = vmatpush1.bf16.msra.mxu0 0
    %326 = vmatprep.subr.bf16.mxu0 0
    %327 = vmatpush1.bf16.msra.mxu0 0
    %328 = vmatprep.mubr.bf16.mxu0 0
    %329 = vmatmul.mubr.bf16.gmra.mrb[0].mxu0 %v224
    %v330 = vpop.f32.mrb[0].mxu0
    %v331 = vadd.f32 %v246, %v330
    %v332 = vpop.f32.mrb[0].mxu0
    %v333 = vpop.f32.mrb[0].mxu0
    %v334 = vadd.f32 %v246, %v333
    %v335 = vpop.f32.mrb[0].mxu0
    %336 = vdwg.mxu0
    %v337 = vpack.c.bf16 %v334, %v331
    %v338 = vld [vmem:[#allocation8] sm:$0xf]
    %v339 = vld [vmem:[#allocation8 + $0x4] sm:$0xf]
    %v340 = vld [vmem:[#allocation8 + $0x8] sm:$0xf]
    %v341 = vld [vmem:[#allocation8 + $0xc] sm:$0xf]
    %v342 = vld [vmem:[#allocation8 + $0x10] sm:$0xf]
    %v343 = vld [vmem:[#allocation8 + $0x14] sm:$0xf]
    %v344 = vld [vmem:[#allocation8 + $0x18] sm:$0xf]
    %v345 = vld [vmem:[#allocation8 + $0x1c] sm:$0xf]
    %v346 = vld [vmem:[#allocation8 + $0x20] sm:$0xf]
    %v347 = vld [vmem:[#allocation8 + $0x24] sm:$0xf]
    %v348 = vld [vmem:[#allocation8 + $0x28] sm:$0xf]
    %v349 = vld [vmem:[#allocation8 + $0x2c] sm:$0xf]
    %v350 = vld [vmem:[#allocation8 + $0x30] sm:$0xf]
    %v351 = vld [vmem:[#allocation8 + $0x34] sm:$0xf]
    %v352 = vld [vmem:[#allocation8 + $0x38] sm:$0xf]
    %v353 = vld [vmem:[#allocation8 + $0x3c] sm:$0xf]
    %v354 = vld [vmem:[%s6] sm:$0x1]
    %v356 = vlaneseq
    %v357 = vshrl.u32 %v356, 7
    %v358 = vsub.s32 0, %v357
    %v359 = vrot.slane %v354, %v358
    %v377 = vunpack.c.l.b16 %v338
    %v378 = vunpack.c.l.b16 %v339
    %v379 = vunpack.c.l.b16 %v340
    %v380 = vunpack.c.l.b16 %v341
    %v381 = vunpack.c.l.b16 %v342
    %v382 = vunpack.c.l.b16 %v343
    %v383 = vunpack.c.l.b16 %v344
    %v384 = vunpack.c.l.b16 %v345
    %v385 = vunpack.c.l.b16 %v346
    %v386 = vunpack.c.l.b16 %v347
    %v387 = vunpack.c.l.b16 %v348
    %v388 = vunpack.c.l.b16 %v349
    %v389 = vunpack.c.l.b16 %v350
    %v390 = vunpack.c.l.b16 %v351
    %v391 = vunpack.c.l.b16 %v352
    %v392 = vunpack.c.l.b16 %v353
    %v393 = vpack.c.b16 %v378, %v377
    %v394 = vpack.c.b16 %v380, %v379
    %v395 = vpack.c.b16 %v382, %v381
    %v396 = vpack.c.b16 %v384, %v383
    %v397 = vpack.c.b16 %v386, %v385
    %v398 = vpack.c.b16 %v388, %v387
    %v399 = vpack.c.b16 %v390, %v389
    %v400 = vpack.c.b16 %v392, %v391
    %409 = vmatprep.subr.bf16.mxu0 0
    %410 = vmatpush1.bf16.msra.mxu0 %v393
    %411 = vmatprep.subr.bf16.mxu0 0
    %412 = vmatpush1.bf16.msra.mxu0 %v394
    %413 = vmatprep.subr.bf16.mxu0 0
    %414 = vmatpush1.bf16.msra.mxu0 %v395
    %415 = vmatprep.subr.bf16.mxu0 0
    %416 = vmatpush1.bf16.msra.mxu0 %v396
    %417 = vmatprep.subr.bf16.mxu0 0
    %418 = vmatpush1.bf16.msra.mxu0 %v397
    %419 = vmatprep.subr.bf16.mxu0 0
    %420 = vmatpush1.bf16.msra.mxu0 %v398
    %421 = vmatprep.subr.bf16.mxu0 0
    %422 = vmatpush1.bf16.msra.mxu0 %v399
    %423 = vmatprep.subr.bf16.mxu0 0
    %424 = vmatpush1.bf16.msra.mxu0 %v400
    %425 = vmatprep.subr.bf16.mxu0 0
    %426 = vmatpush1.bf16.msra.mxu0 0
    %427 = vmatprep.subr.bf16.mxu0 0
    %428 = vmatpush1.bf16.msra.mxu0 0
    %429 = vmatprep.subr.bf16.mxu0 0
    %430 = vmatpush1.bf16.msra.mxu0 0
    %431 = vmatprep.subr.bf16.mxu0 0
    %432 = vmatpush1.bf16.msra.mxu0 0
    %433 = vmatprep.subr.bf16.mxu0 0
    %434 = vmatpush1.bf16.msra.mxu0 0
    %435 = vmatprep.subr.bf16.mxu0 0
    %436 = vmatpush1.bf16.msra.mxu0 0
    %437 = vmatprep.subr.bf16.mxu0 0
    %438 = vmatpush1.bf16.msra.mxu0 0
    %439 = vmatprep.subr.bf16.mxu0 0
    %440 = vmatpush1.bf16.msra.mxu0 0
    %441 = vmatprep.mubr.bf16.mxu0 0
    %442 = vmatmul.mubr.bf16.gmra.mrb[0].mxu0 %v337
    %v443 = vpop.f32.mrb[0].mxu0
    %v444 = vadd.f32 %v359, %v443
    %v445 = vpop.f32.mrb[0].mxu0
    %v446 = vpop.f32.mrb[0].mxu0
    %v447 = vadd.f32 %v359, %v446
    %v448 = vpop.f32.mrb[0].mxu0
    %449 = vdwg.mxu0
    %v450 = vmax.f32 %v444, 0.0
    %v451 = vmax.f32 %v447, 0.0
    %v452 = vpack.c.bf16 %v451, %v450
    %v453 = vld [vmem:[#allocation10] sm:$0xf]
    %v454 = vld [vmem:[#allocation10 + $0x4] sm:$0xf]
    %v455 = vld [vmem:[#allocation10 + $0x8] sm:$0xf]
    %v456 = vld [vmem:[#allocation10 + $0xc] sm:$0xf]
    %v457 = vld [vmem:[#allocation10 + $0x10] sm:$0xf]
    %v458 = vld [vmem:[#allocation10 + $0x14] sm:$0xf]
    %v459 = vld [vmem:[#allocation10 + $0x18] sm:$0xf]
    %v460 = vld [vmem:[#allocation10 + $0x1c] sm:$0xf]
    %v461 = vld [vmem:[#allocation10 + $0x20] sm:$0xf]
    %v462 = vld [vmem:[#allocation10 + $0x24] sm:$0xf]
    %v463 = vld [vmem:[#allocation10 + $0x28] sm:$0xf]
    %v464 = vld [vmem:[#allocation10 + $0x2c] sm:$0xf]
    %v465 = vld [vmem:[#allocation10 + $0x30] sm:$0xf]
    %v466 = vld [vmem:[#allocation10 + $0x34] sm:$0xf]
    %v467 = vld [vmem:[#allocation10 + $0x38] sm:$0xf]
    %v468 = vld [vmem:[#allocation10 + $0x3c] sm:$0xf]
    %v469 = vld [vmem:[%s8] sm:$0x1]
    %v471 = vlaneseq
    %v472 = vshrl.u32 %v471, 7
    %v473 = vsub.s32 0, %v472
    %v474 = vrot.slane %v469, %v473
    %v492 = vunpack.c.l.b16 %v453
    %v493 = vunpack.c.l.b16 %v454
    %v494 = vunpack.c.l.b16 %v455
    %v495 = vunpack.c.l.b16 %v456
    %v496 = vunpack.c.l.b16 %v457
    %v497 = vunpack.c.l.b16 %v458
    %v498 = vunpack.c.l.b16 %v459
    %v499 = vunpack.c.l.b16 %v460
    %v500 = vunpack.c.l.b16 %v461
    %v501 = vunpack.c.l.b16 %v462
    %v502 = vunpack.c.l.b16 %v463
    %v503 = vunpack.c.l.b16 %v464
    %v504 = vunpack.c.l.b16 %v465
    %v505 = vunpack.c.l.b16 %v466
    %v506 = vunpack.c.l.b16 %v467
    %v507 = vunpack.c.l.b16 %v468
    %v508 = vpack.c.b16 %v493, %v492
    %v509 = vpack.c.b16 %v495, %v494
    %v510 = vpack.c.b16 %v497, %v496
    %v511 = vpack.c.b16 %v499, %v498
    %v512 = vpack.c.b16 %v501, %v500
    %v513 = vpack.c.b16 %v503, %v502
    %v514 = vpack.c.b16 %v505, %v504
    %v515 = vpack.c.b16 %v507, %v506
    %524 = vmatprep.subr.bf16.mxu0 0
    %525 = vmatpush1.bf16.msra.mxu0 %v508
    %526 = vmatprep.subr.bf16.mxu0 0
    %527 = vmatpush1.bf16.msra.mxu0 %v509
    %528 = vmatprep.subr.bf16.mxu0 0
    %529 = vmatpush1.bf16.msra.mxu0 %v510
    %530 = vmatprep.subr.bf16.mxu0 0
    %531 = vmatpush1.bf16.msra.mxu0 %v511
    %532 = vmatprep.subr.bf16.mxu0 0
    %533 = vmatpush1.bf16.msra.mxu0 %v512
    %534 = vmatprep.subr.bf16.mxu0 0
    %535 = vmatpush1.bf16.msra.mxu0 %v513
    %536 = vmatprep.subr.bf16.mxu0 0
    %537 = vmatpush1.bf16.msra.mxu0 %v514
    %538 = vmatprep.subr.bf16.mxu0 0
    %539 = vmatpush1.bf16.msra.mxu0 %v515
    %540 = vmatprep.subr.bf16.mxu0 0
    %541 = vmatpush1.bf16.msra.mxu0 0
    %542 = vmatprep.subr.bf16.mxu0 0
    %543 = vmatpush1.bf16.msra.mxu0 0
    %544 = vmatprep.subr.bf16.mxu0 0
    %545 = vmatpush1.bf16.msra.mxu0 0
    %546 = vmatprep.subr.bf16.mxu0 0
    %547 = vmatpush1.bf16.msra.mxu0 0
    %548 = vmatprep.subr.bf16.mxu0 0
    %549 = vmatpush1.bf16.msra.mxu0 0
    %550 = vmatprep.subr.bf16.mxu0 0
    %551 = vmatpush1.bf16.msra.mxu0 0
    %552 = vmatprep.subr.bf16.mxu0 0
    %553 = vmatpush1.bf16.msra.mxu0 0
    %554 = vmatprep.subr.bf16.mxu0 0
    %555 = vmatpush1.bf16.msra.mxu0 0
    %556 = vmatprep.mubr.bf16.mxu0 0
    %557 = vmatmul.mubr.bf16.gmra.mrb[0].mxu0 %v452
    %v558 = vpop.f32.mrb[0].mxu0
    %v559 = vadd.f32 %v474, %v558
    %v560 = vpop.f32.mrb[0].mxu0
    %v561 = vpop.f32.mrb[0].mxu0
    %v562 = vadd.f32 %v474, %v561
    %v563 = vpop.f32.mrb[0].mxu0
    %564 = vdwg.mxu0
    %v565 = vpack.c.bf16 %v562, %v559
    %v567 = vunpack.c.l.b16 %v565
    %v568 = vunpack.c.h.b16 %v565
    %v569 = vpack.c.b16 %v567, %v567
    %v570 = vpack.c.b16 %v568, %v568
    %573 = vst [vmem:[#allocation11] sm:$0xf] %v569
    %574 = vst [vmem:[#allocation11 + $0x4] sm:$0xf] %v570
    // Predicated region
    $region58: #{tpu_custom_call.1} parent=1 // pred_check
      _
    $region59: #{tpu_custom_call.1} parent=1 // pred_check_branch
      %576 = sbr.rel (0) target = $region61
    $region60: #{tpu_custom_call.1} parent=1 // pred_region
      %s578 = ssub.s32 128, 128
      %579 = vsyncadd [#allocation4], %s578
      %s580 = sshll.u32 [#allocation11], 4
      %s581 = int_to_ptr.vmem [resolvable:$true] %s580
      %586 = dma.vmem_to_hbm [thread:$0]  %s581, 128, %s9, [#allocation4], 64, 64, 4
    $region61: #{tpu_custom_call.1} parent=1 // pred_fallthru
      _
    // Predicated region
    $region62: #{tpu_custom_call.1} parent=1 // pred_check
      _
    $region63: #{tpu_custom_call.1} parent=1 // pred_check_branch
      %588 = sbr.rel (0) target = $region65
    $region64: #{tpu_custom_call.1} parent=1 // pred_region
      %589 = dma.done [#allocation4], 128
    $region65: #{tpu_custom_call.1} parent=1 // pred_fallthru
      _
    %590 = vsyncpa [#allocation3], 1
    %591 = vsyncpa [#allocation6], 1
    %592 = vsyncpa [#allocation9], 1
    %593 = vsyncpa [#allocation4], 1

// kernel: tpu_custom_call.1
$region0: #{tpu_custom_call.1}
  #allocation0 [shape = 'u32[]', space=smem, size = 0x4, offset = 0x4, fixed_abs, tag = 'smem constant byte address 0x4 - core index']
  #allocation1 [shape = 'u32[144,128]{1,0:T(1,128)}', space=vmem, size = 0x12000, scoped, tag = 'internal scratch']
  %s0 = inlined_call_operand.hbm [shape: bf16[16,128], index: 0, kind: input, shape index: {}]
  %s1 = inlined_call_operand.hbm [shape: bf16[128,128], index: 1, kind: input, shape index: {}]
  %s2 = inlined_call_operand.vmem [shape: f32[1,128], index: 2, kind: input, shape index: {}]
  %s3 = inlined_call_operand.hbm [shape: bf16[128,128], index: 3, kind: input, shape index: {}]
  %s4 = inlined_call_operand.vmem [shape: f32[1,128], index: 4, kind: input, shape index: {}]
  %s5 = inlined_call_operand.hbm [shape: bf16[128,128], index: 5, kind: input, shape index: {}]
  %s6 = inlined_call_operand.vmem [shape: f32[1,128], index: 6, kind: input, shape index: {}]
  %s7 = inlined_call_operand.hbm [shape: bf16[128,128], index: 7, kind: input, shape index: {}]
  %s8 = inlined_call_operand.vmem [shape: f32[1,128], index: 8, kind: input, shape index: {}]
  %s9 = inlined_call_operand.hbm [shape: bf16[16,128], index: 9, kind: output, shape index: {}]
  %s10 = sld [smem:[#allocation0]]
  $region66: #{tpu_custom_call.1} parent=0
    _
  %s12 = ssub.s32 1, %s10
  %s13 = scalar_select 0, %s12, %s10
  $region1: #{tpu_custom_call.1} parent=0
    #allocation2 [shape = 'u8[4096]{0}', space=vmem, size = 0x1000, scoped, tag = 'input window, operand 0, single buffered']
    #allocation3 [shape = 's32[1]{0}', space=sflag, size = 0x4, scoped, tag = 'scoped memory for tpu_custom_call.1']
    #allocation4 [shape = 's32[1]{0}', space=sflag, size = 0x4, scoped, tag = 'scoped memory for tpu_custom_call.1']
    #allocation5 [shape = 'u8[32768]{0}', space=vmem, size = 0x8000, scoped, tag = 'input window, operand 1, single buffered']
    #allocation6 [shape = 's32[1]{0}', space=sflag, size = 0x4, scoped, tag = 'scoped memory for tpu_custom_call.1']
    #allocation7 [shape = 'u8[32768]{0}', space=vmem, size = 0x8000, scoped, tag = 'input window, operand 3, single buffered']
    #allocation8 [shape = 'u8[32768]{0}', space=vmem, size = 0x8000, scoped, tag = 'input window, operand 5, single buffered']
    #allocation9 [shape = 's32[1]{0}', space=sflag, size = 0x4, scoped, tag = 'scoped memory for tpu_custom_call.1']
    #allocation10 [shape = 'u8[32768]{0}', space=vmem, size = 0x8000, scoped, tag = 'input window, operand 7, single buffered']
    #allocation11 [shape = 'u8[4096]{0}', space=vmem, size = 0x1000, scoped, tag = 'output window, operand 0, single buffered']
    %14 = vsyncpa [#allocation3], 0
    %15 = vsyncpa [#allocation6], 0
    %16 = vsyncpa [#allocation9], 0
    %17 = vsyncpa [#allocation4], 0
    // Predicated region
    $region2: #{tpu_custom_call.1} parent=1 // pred_check
      _
    $region3: #{tpu_custom_call.1} parent=1 // pred_check_branch
      %19 = sbr.rel (0) target = $region5
    $region4: #{tpu_custom_call.1} parent=1 // pred_region
      %s21 = ssub.s32 128, 128
      %22 = vsyncadd [#allocation3], %s21
      %s23 = sshll.u32 [#allocation2], 4
      %s24 = int_to_ptr.vmem [resolvable:$true] %s23
      %29 = dma.hbm_to_vmem [thread:$0]  %s0, 128, %s24, [#allocation3], 64, 64, 4
    $region5: #{tpu_custom_call.1} parent=1 // pred_fallthru
      _
    // Predicated region
    $region6: #{tpu_custom_call.1} parent=1 // pred_check
      _
    $region7: #{tpu_custom_call.1} parent=1 // pred_check_branch
      %31 = sbr.rel (0) target = $region9
    $region8: #{tpu_custom_call.1} parent=1 // pred_region
      %s33 = ssub.s32 1024, 1024
      %34 = vsyncadd [#allocation6], %s33
      %s35 = sshll.u32 [#allocation5], 4
      %s36 = int_to_ptr.vmem [resolvable:$true] %s35
      %41 = dma.hbm_to_vmem [thread:$0]  %s1, 1024, %s36, [#allocation6], 64, 64, 4
    $region9: #{tpu_custom_call.1} parent=1 // pred_fallthru
      _
    // Predicated region
    $region10: #{tpu_custom_call.1} parent=1 // pred_check
      _
    $region11: #{tpu_custom_call.1} parent=1 // pred_check_branch
      %43 = sbr.rel (0) target = $region13
    $region12: #{tpu_custom_call.1} parent=1 // pred_region
      _
    $region13: #{tpu_custom_call.1} parent=1 // pred_fallthru
      _
    // Predicated region
    $region14: #{tpu_custom_call.1} parent=1 // pred_check
      _
    $region15: #{tpu_custom_call.1} parent=1 // pred_check_branch
      %45 = sbr.rel (0) target = $region17
    $region16: #{tpu_custom_call.1} parent=1 // pred_region
      %s47 = ssub.s32 1024, 1024
      %48 = vsyncadd [#allocation6], %s47
      %s49 = sshll.u32 [#allocation7], 4
      %s50 = int_to_ptr.vmem [resolvable:$true] %s49
      %55 = dma.hbm_to_vmem [thread:$0]  %s3, 1024, %s50, [#allocation6], 64, 64, 4
    $region17: #{tpu_custom_call.1} parent=1 // pred_fallthru
      _
    // Predicated region
    $region18: #{tpu_custom_call.1} parent=1 // pred_check
      _
    $region19: #{tpu_custom_call.1} parent=1 // pred_check_branch
      %57 = sbr.rel (0) target = $region21
    $region20: #{tpu_custom_call.1} parent=1 // pred_region
      _
    $region21: #{tpu_custom_call.1} parent=1 // pred_fallthru
      _
    // Predicated region
    $region22: #{tpu_custom_call.1} parent=1 // pred_check
      _
    $region23: #{tpu_custom_call.1} parent=1 // pred_check_branch
      %59 = sbr.rel (0) target = $region25
    $region24: #{tpu_custom_call.1} parent=1 // pred_region
      %s61 = ssub.s32 1024, 1024
      %62 = vsyncadd [#allocation9], %s61
      %s63 = sshll.u32 [#allocation8], 4
      %s64 = int_to_ptr.vmem [resolvable:$true] %s63
      %69 = dma.hbm_to_vmem [thread:$0]  %s5, 1024, %s64, [#allocation9], 64, 64, 4
    $region25: #{tpu_custom_call.1} parent=1 // pred_fallthru
      _
    // Predicated region
    $region26: #{tpu_custom_call.1} parent=1 // pred_check
      _
    $region27: #{tpu_custom_call.1} parent=1 // pred_check_branch
      %71 = sbr.rel (0) target = $region29
    $region28: #{tpu_custom_call.1} parent=1 // pred_region
      _
    $region29: #{tpu_custom_call.1} parent=1 // pred_fallthru
      _
    // Predicated region
    $region30: #{tpu_custom_call.1} parent=1 // pred_check
      _
    $region31: #{tpu_custom_call.1} parent=1 // pred_check_branch
      %73 = sbr.rel (0) target = $region33
    $region32: #{tpu_custom_call.1} parent=1 // pred_region
      %s75 = ssub.s32 1024, 1024
      %76 = vsyncadd [#allocation9], %s75
      %s77 = sshll.u32 [#allocation10], 4
      %s78 = int_to_ptr.vmem [resolvable:$true] %s77
      %83 = dma.hbm_to_vmem [thread:$0]  %s7, 1024, %s78, [#allocation9], 64, 64, 4
    $region33: #{tpu_custom_call.1} parent=1 // pred_fallthru
      _
    // Predicated region
    $region34: #{tpu_custom_call.1} parent=1 // pred_check
      _
    $region35: #{tpu_custom_call.1} parent=1 // pred_check_branch
      %85 = sbr.rel (0) target = $region37
    $region36: #{tpu_custom_call.1} parent=1 // pred_region
      _
    $region37: #{tpu_custom_call.1} parent=1 // pred_fallthru
      _
    // Predicated region
    $region38: #{tpu_custom_call.1} parent=1 // pred_check
      _
    $region39: #{tpu_custom_call.1} parent=1 // pred_check_branch
      %87 = sbr.rel (0) target = $region41
    $region40: #{tpu_custom_call.1} parent=1 // pred_region
      %88 = dma.done [#allocation3], 128
    $region41: #{tpu_custom_call.1} parent=1 // pred_fallthru
      _
    // Predicated region
    $region42: #{tpu_custom_call.1} parent=1 // pred_check
      _
    $region43: #{tpu_custom_call.1} parent=1 // pred_check_branch
      %90 = sbr.rel (0) target = $region45
    $region44: #{tpu_custom_call.1} parent=1 // pred_region
      %91 = dma.done [#allocation6], 1024
    $region45: #{tpu_custom_call.1} parent=1 // pred_fallthru
      _
    // Predicated region
    $region46: #{tpu_custom_call.1} parent=1 // pred_check
      _
    $region47: #{tpu_custom_call.1} parent=1 // pred_check_branch
      %93 = sbr.rel (0) target = $region49
    $region48: #{tpu_custom_call.1} parent=1 // pred_region
      %94 = dma.done [#allocation6], 1024
    $region49: #{tpu_custom_call.1} parent=1 // pred_fallthru
      _
    // Predicated region
    $region50: #{tpu_custom_call.1} parent=1 // pred_check
      _
    $region51: #{tpu_custom_call.1} parent=1 // pred_check_branch
      %96 = sbr.rel (0) target = $region53
    $region52: #{tpu_custom_call.1} parent=1 // pred_region
      %97 = dma.done [#allocation9], 1024
    $region53: #{tpu_custom_call.1} parent=1 // pred_fallthru
      _
    // Predicated region
    $region54: #{tpu_custom_call.1} parent=1 // pred_check
      _
    $region55: #{tpu_custom_call.1} parent=1 // pred_check_branch
      %99 = sbr.rel (0) target = $region57
    $region56: #{tpu_custom_call.1} parent=1 // pred_region
      %100 = dma.done [#allocation9], 1024
    $region57: #{tpu_custom_call.1} parent=1 // pred_fallthru
      _
    %v102 = vld [vmem:[#allocation2] sm:$0xf]
    %v103 = vld [vmem:[#allocation2 + $0x4] sm:$0xf]
    %v104 = vld [vmem:[#allocation5] sm:$0xf]
    %v105 = vld [vmem:[#allocation5 + $0x4] sm:$0xf]
    %v106 = vld [vmem:[#allocation5 + $0x8] sm:$0xf]
    %v107 = vld [vmem:[#allocation5 + $0xc] sm:$0xf]
    %v108 = vld [vmem:[#allocation5 + $0x10] sm:$0xf]
    %v109 = vld [vmem:[#allocation5 + $0x14] sm:$0xf]
    %v110 = vld [vmem:[#allocation5 + $0x18] sm:$0xf]
    %v111 = vld [vmem:[#allocation5 + $0x1c] sm:$0xf]
    %v112 = vld [vmem:[#allocation5 + $0x20] sm:$0xf]
    %v113 = vld [vmem:[#allocation5 + $0x24] sm:$0xf]
    %v114 = vld [vmem:[#allocation5 + $0x28] sm:$0xf]
    %v115 = vld [vmem:[#allocation5 + $0x2c] sm:$0xf]
    %v116 = vld [vmem:[#allocation5 + $0x30] sm:$0xf]
    %v117 = vld [vmem:[#allocation5 + $0x34] sm:$0xf]
    %v118 = vld [vmem:[#allocation5 + $0x38] sm:$0xf]
    %v119 = vld [vmem:[#allocation5 + $0x3c] sm:$0xf]
    %v120 = vld [vmem:[%s2] sm:$0x1]
    %v122 = vlaneseq
    %v123 = vshrl.u32 %v122, 7
    %v124 = vsub.s32 0, %v123
    %v125 = vrot.slane %v120, %v124
    %v129 = vunpack.c.l.b16 %v102
    %v130 = vunpack.c.l.b16 %v103
    %v131 = vpack.c.b16 %v130, %v129
    %v149 = vunpack.c.l.b16 %v104
    %v150 = vunpack.c.l.b16 %v105
    %v151 = vunpack.c.l.b16 %v106
    %v152 = vunpack.c.l.b16 %v107
    %v153 = vunpack.c.l.b16 %v108
    %v154 = vunpack.c.l.b16 %v109
    %v155 = vunpack.c.l.b16 %v110
    %v156 = vunpack.c.l.b16 %v111
    %v157 = vunpack.c.l.b16 %v112
    %v158 = vunpack.c.l.b16 %v113
    %v159 = vunpack.c.l.b16 %v114
    %v160 = vunpack.c.l.b16 %v115
    %v161 = vunpack.c.l.b16 %v116
    %v162 = vunpack.c.l.b16 %v117
    %v163 = vunpack.c.l.b16 %v118
    %v164 = vunpack.c.l.b16 %v119
    %v165 = vpack.c.b16 %v150, %v149
    %v166 = vpack.c.b16 %v152, %v151
    %v167 = vpack.c.b16 %v154, %v153
    %v168 = vpack.c.b16 %v156, %v155
    %v169 = vpack.c.b16 %v158, %v157
    %v170 = vpack.c.b16 %v160, %v159
    %v171 = vpack.c.b16 %v162, %v161
    %v172 = vpack.c.b16 %v164, %v163
    %181 = vmatprep.subr.bf16.mxu0 0
    %182 = vmatpush1.bf16.msra.mxu0 %v165
    %183 = vmatprep.subr.bf16.mxu0 0
    %184 = vmatpush1.bf16.msra.mxu0 %v166
    %185 = vmatprep.subr.bf16.mxu0 0
    %186 = vmatpush1.bf16.msra.mxu0 %v167
    %187 = vmatprep.subr.bf16.mxu0 0
    %188 = vmatpush1.bf16.msra.mxu0 %v168
    %189 = vmatprep.subr.bf16.mxu0 0
    %190 = vmatpush1.bf16.msra.mxu0 %v169
    %191 = vmatprep.subr.bf16.mxu0 0
    %192 = vmatpush1.bf16.msra.mxu0 %v170
    %193 = vmatprep.subr.bf16.mxu0 0
    %194 = vmatpush1.bf16.msra.mxu0 %v171
    %195 = vmatprep.subr.bf16.mxu0 0
    %196 = vmatpush1.bf16.msra.mxu0 %v172
    %197 = vmatprep.subr.bf16.mxu0 0
    %198 = vmatpush1.bf16.msra.mxu0 0
    %199 = vmatprep.subr.bf16.mxu0 0
    %200 = vmatpush1.bf16.msra.mxu0 0
    %201 = vmatprep.subr.bf16.mxu0 0
    %202 = vmatpush1.bf16.msra.mxu0 0
    %203 = vmatprep.subr.bf16.mxu0 0
    %204 = vmatpush1.bf16.msra.mxu0 0
    %205 = vmatprep.subr.bf16.mxu0 0
    %206 = vmatpush1.bf16.msra.mxu0 0
    %207 = vmatprep.subr.bf16.mxu0 0
    %208 = vmatpush1.bf16.msra.mxu0 0
    %209 = vmatprep.subr.bf16.mxu0 0
    %210 = vmatpush1.bf16.msra.mxu0 0
    %211 = vmatprep.subr.bf16.mxu0 0
    %212 = vmatpush1.bf16.msra.mxu0 0
    %213 = vmatprep.mubr.bf16.mxu0 0
    %214 = vmatmul.mubr.bf16.gmra.mrb[0].mxu0 %v131
    %v215 = vpop.f32.mrb[0].mxu0
    %v216 = vadd.f32 %v125, %v215
    %v217 = vpop.f32.mrb[0].mxu0
    %v218 = vpop.f32.mrb[0].mxu0
    %v219 = vadd.f32 %v125, %v218
    %v220 = vpop.f32.mrb[0].mxu0
    %221 = vdwg.mxu0
    %v222 = vmax.f32 %v216, 0.0
    %v223 = vmax.f32 %v219, 0.0
    %v224 = vpack.c.bf16 %v223, %v222
    %v225 = vld [vmem:[#allocation7] sm:$0xf]
    %v226 = vld [vmem:[#allocation7 + $0x4] sm:$0xf]
    %v227 = vld [vmem:[#allocation7 + $0x8] sm:$0xf]
    %v228 = vld [vmem:[#allocation7 + $0xc] sm:$0xf]
    %v229 = vld [vmem:[#allocation7 + $0x10] sm:$0xf]
    %v230 = vld [vmem:[#allocation7 + $0x14] sm:$0xf]
    %v231 = vld [vmem:[#allocation7 + $0x18] sm:$0xf]
    %v232 = vld [vmem:[#allocation7 + $0x1c] sm:$0xf]
    %v233 = vld [vmem:[#allocation7 + $0x20] sm:$0xf]
    %v234 = vld [vmem:[#allocation7 + $0x24] sm:$0xf]
    %v235 = vld [vmem:[#allocation7 + $0x28] sm:$0xf]
    %v236 = vld [vmem:[#allocation7 + $0x2c] sm:$0xf]
    %v237 = vld [vmem:[#allocation7 + $0x30] sm:$0xf]
    %v238 = vld [vmem:[#allocation7 + $0x34] sm:$0xf]
    %v239 = vld [vmem:[#allocation7 + $0x38] sm:$0xf]
    %v240 = vld [vmem:[#allocation7 + $0x3c] sm:$0xf]
    %v241 = vld [vmem:[%s4] sm:$0x1]
    %v243 = vlaneseq
    %v244 = vshrl.u32 %v243, 7
    %v245 = vsub.s32 0, %v244
    %v246 = vrot.slane %v241, %v245
    %v264 = vunpack.c.l.b16 %v225
    %v265 = vunpack.c.l.b16 %v226
    %v266 = vunpack.c.l.b16 %v227
    %v267 = vunpack.c.l.b16 %v228
    %v268 = vunpack.c.l.b16 %v229
    %v269 = vunpack.c.l.b16 %v230
    %v270 = vunpack.c.l.b16 %v231
    %v271 = vunpack.c.l.b16 %v232
    %v272 = vunpack.c.l.b16 %v233
    %v273 = vunpack.c.l.b16 %v234
    %v274 = vunpack.c.l.b16 %v235
    %v275 = vunpack.c.l.b16 %v236
    %v276 = vunpack.c.l.b16 %v237
    %v277 = vunpack.c.l.b16 %v238
    %v278 = vunpack.c.l.b16 %v239
    %v279 = vunpack.c.l.b16 %v240
    %v280 = vpack.c.b16 %v265, %v264
    %v281 = vpack.c.b16 %v267, %v266
    %v282 = vpack.c.b16 %v269, %v268
    %v283 = vpack.c.b16 %v271, %v270
    %v284 = vpack.c.b16 %v273, %v272
    %v285 = vpack.c.b16 %v275, %v274
    %v286 = vpack.c.b16 %v277, %v276
    %v287 = vpack.c.b16 %v279, %v278
    %296 = vmatprep.subr.bf16.mxu0 0
    %297 = vmatpush1.bf16.msra.mxu0 %v280
    %298 = vmatprep.subr.bf16.mxu0 0
    %299 = vmatpush1.bf16.msra.mxu0 %v281
    %300 = vmatprep.subr.bf16.mxu0 0
    %301 = vmatpush1.bf16.msra.mxu0 %v282
    %302 = vmatprep.subr.bf16.mxu0 0
    %303 = vmatpush1.bf16.msra.mxu0 %v283
    %304 = vmatprep.subr.bf16.mxu0 0
    %305 = vmatpush1.bf16.msra.mxu0 %v284
    %306 = vmatprep.subr.bf16.mxu0 0
    %307 = vmatpush1.bf16.msra.mxu0 %v285
    %308 = vmatprep.subr.bf16.mxu0 0
    %309 = vmatpush1.bf16.msra.mxu0 %v286
    %310 = vmatprep.subr.bf16.mxu0 0
    %311 = vmatpush1.bf16.msra.mxu0 %v287
    %312 = vmatprep.subr.bf16.mxu0 0
    %313 = vmatpush1.bf16.msra.mxu0 0
    %314 = vmatprep.subr.bf16.mxu0 0
    %315 = vmatpush1.bf16.msra.mxu0 0
    %316 = vmatprep.subr.bf16.mxu0 0
    %317 = vmatpush1.bf16.msra.mxu0 0
    %318 = vmatprep.subr.bf16.mxu0 0
    %319 = vmatpush1.bf16.msra.mxu0 0
    %320 = vmatprep.subr.bf16.mxu0 0
    %321 = vmatpush1.bf16.msra.mxu0 0
    %322 = vmatprep.subr.bf16.mxu0 0
    %323 = vmatpush1.bf16.msra.mxu0 0
    %324 = vmatprep.subr.bf16.mxu0 0
    %325 = vmatpush1.bf16.msra.mxu0 0
    %326 = vmatprep.subr.bf16.mxu0 0
    %327 = vmatpush1.bf16.msra.mxu0 0
    %328 = vmatprep.mubr.bf16.mxu0 0
    %329 = vmatmul.mubr.bf16.gmra.mrb[0].mxu0 %v224
    %v330 = vpop.f32.mrb[0].mxu0
    %v331 = vadd.f32 %v246, %v330
    %v332 = vpop.f32.mrb[0].mxu0
    %v333 = vpop.f32.mrb[0].mxu0
    %v334 = vadd.f32 %v246, %v333
    %v335 = vpop.f32.mrb[0].mxu0
    %336 = vdwg.mxu0
    %v337 = vpack.c.bf16 %v334, %v331
    %v338 = vld [vmem:[#allocation8] sm:$0xf]
    %v339 = vld [vmem:[#allocation8 + $0x4] sm:$0xf]
    %v340 = vld [vmem:[#allocation8 + $0x8] sm:$0xf]
    %v341 = vld [vmem:[#allocation8 + $0xc] sm:$0xf]
    %v342 = vld [vmem:[#allocation8 + $0x10] sm:$0xf]
    %v343 = vld [vmem:[#allocation8 + $0x14] sm:$0xf]
    %v344 = vld [vmem:[#allocation8 + $0x18] sm:$0xf]
    %v345 = vld [vmem:[#allocation8 + $0x1c] sm:$0xf]
    %v346 = vld [vmem:[#allocation8 + $0x20] sm:$0xf]
    %v347 = vld [vmem:[#allocation8 + $0x24] sm:$0xf]
    %v348 = vld [vmem:[#allocation8 + $0x28] sm:$0xf]
    %v349 = vld [vmem:[#allocation8 + $0x2c] sm:$0xf]
    %v350 = vld [vmem:[#allocation8 + $0x30] sm:$0xf]
    %v351 = vld [vmem:[#allocation8 + $0x34] sm:$0xf]
    %v352 = vld [vmem:[#allocation8 + $0x38] sm:$0xf]
    %v353 = vld [vmem:[#allocation8 + $0x3c] sm:$0xf]
    %v354 = vld [vmem:[%s6] sm:$0x1]
    %v356 = vlaneseq
    %v357 = vshrl.u32 %v356, 7
    %v358 = vsub.s32 0, %v357
    %v359 = vrot.slane %v354, %v358
    %v377 = vunpack.c.l.b16 %v338
    %v378 = vunpack.c.l.b16 %v339
    %v379 = vunpack.c.l.b16 %v340
    %v380 = vunpack.c.l.b16 %v341
    %v381 = vunpack.c.l.b16 %v342
    %v382 = vunpack.c.l.b16 %v343
    %v383 = vunpack.c.l.b16 %v344
    %v384 = vunpack.c.l.b16 %v345
    %v385 = vunpack.c.l.b16 %v346
    %v386 = vunpack.c.l.b16 %v347
    %v387 = vunpack.c.l.b16 %v348
    %v388 = vunpack.c.l.b16 %v349
    %v389 = vunpack.c.l.b16 %v350
    %v390 = vunpack.c.l.b16 %v351
    %v391 = vunpack.c.l.b16 %v352
    %v392 = vunpack.c.l.b16 %v353
    %v393 = vpack.c.b16 %v378, %v377
    %v394 = vpack.c.b16 %v380, %v379
    %v395 = vpack.c.b16 %v382, %v381
    %v396 = vpack.c.b16 %v384, %v383
    %v397 = vpack.c.b16 %v386, %v385
    %v398 = vpack.c.b16 %v388, %v387
    %v399 = vpack.c.b16 %v390, %v389
    %v400 = vpack.c.b16 %v392, %v391
    %409 = vmatprep.subr.bf16.mxu0 0
    %410 = vmatpush1.bf16.msra.mxu0 %v393
    %411 = vmatprep.subr.bf16.mxu0 0
    %412 = vmatpush1.bf16.msra.mxu0 %v394
    %413 = vmatprep.subr.bf16.mxu0 0
    %414 = vmatpush1.bf16.msra.mxu0 %v395
    %415 = vmatprep.subr.bf16.mxu0 0
    %416 = vmatpush1.bf16.msra.mxu0 %v396
    %417 = vmatprep.subr.bf16.mxu0 0
    %418 = vmatpush1.bf16.msra.mxu0 %v397
    %419 = vmatprep.subr.bf16.mxu0 0
    %420 = vmatpush1.bf16.msra.mxu0 %v398
    %421 = vmatprep.subr.bf16.mxu0 0
    %422 = vmatpush1.bf16.msra.mxu0 %v399
    %423 = vmatprep.subr.bf16.mxu0 0
    %424 = vmatpush1.bf16.msra.mxu0 %v400
    %425 = vmatprep.subr.bf16.mxu0 0
    %426 = vmatpush1.bf16.msra.mxu0 0
    %427 = vmatprep.subr.bf16.mxu0 0
    %428 = vmatpush1.bf16.msra.mxu0 0
    %429 = vmatprep.subr.bf16.mxu0 0
    %430 = vmatpush1.bf16.msra.mxu0 0
    %431 = vmatprep.subr.bf16.mxu0 0
    %432 = vmatpush1.bf16.msra.mxu0 0
    %433 = vmatprep.subr.bf16.mxu0 0
    %434 = vmatpush1.bf16.msra.mxu0 0
    %435 = vmatprep.subr.bf16.mxu0 0
    %436 = vmatpush1.bf16.msra.mxu0 0
    %437 = vmatprep.subr.bf16.mxu0 0
    %438 = vmatpush1.bf16.msra.mxu0 0
    %439 = vmatprep.subr.bf16.mxu0 0
    %440 = vmatpush1.bf16.msra.mxu0 0
    %441 = vmatprep.mubr.bf16.mxu0 0
    %442 = vmatmul.mubr.bf16.gmra.mrb[0].mxu0 %v337
    %v443 = vpop.f32.mrb[0].mxu0
    %v444 = vadd.f32 %v359, %v443
    %v445 = vpop.f32.mrb[0].mxu0
    %v446 = vpop.f32.mrb[0].mxu0
    %v447 = vadd.f32 %v359, %v446
    %v448 = vpop.f32.mrb[0].mxu0
    %449 = vdwg.mxu0
    %v450 = vmax.f32 %v444, 0.0
    %v451 = vmax.f32 %v447, 0.0
    %v452 = vpack.c.bf16 %v451, %v450
    %v453 = vld [vmem:[#allocation10] sm:$0xf]
    %v454 = vld [vmem:[#allocation10 + $0x4] sm:$0xf]
    %v455 = vld [vmem:[#allocation10 + $0x8] sm:$0xf]
    %v456 = vld [vmem:[#allocation10 + $0xc] sm:$0xf]
    %v457 = vld [vmem:[#allocation10 + $0x10] sm:$0xf]
    %v458 = vld [vmem:[#allocation10 + $0x14] sm:$0xf]
    %v459 = vld [vmem:[#allocation10 + $0x18] sm:$0xf]
    %v460 = vld [vmem:[#allocation10 + $0x1c] sm:$0xf]
    %v461 = vld [vmem:[#allocation10 + $0x20] sm:$0xf]
    %v462 = vld [vmem:[#allocation10 + $0x24] sm:$0xf]
    %v463 = vld [vmem:[#allocation10 + $0x28] sm:$0xf]
    %v464 = vld [vmem:[#allocation10 + $0x2c] sm:$0xf]
    %v465 = vld [vmem:[#allocation10 + $0x30] sm:$0xf]
    %v466 = vld [vmem:[#allocation10 + $0x34] sm:$0xf]
    %v467 = vld [vmem:[#allocation10 + $0x38] sm:$0xf]
    %v468 = vld [vmem:[#allocation10 + $0x3c] sm:$0xf]
    %v469 = vld [vmem:[%s8] sm:$0x1]
    %v471 = vlaneseq
    %v472 = vshrl.u32 %v471, 7
    %v473 = vsub.s32 0, %v472
    %v474 = vrot.slane %v469, %v473
    %v492 = vunpack.c.l.b16 %v453
    %v493 = vunpack.c.l.b16 %v454
    %v494 = vunpack.c.l.b16 %v455
    %v495 = vunpack.c.l.b16 %v456
    %v496 = vunpack.c.l.b16 %v457
    %v497 = vunpack.c.l.b16 %v458
    %v498 = vunpack.c.l.b16 %v459
    %v499 = vunpack.c.l.b16 %v460
    %v500 = vunpack.c.l.b16 %v461
    %v501 = vunpack.c.l.b16 %v462
    %v502 = vunpack.c.l.b16 %v463
    %v503 = vunpack.c.l.b16 %v464
    %v504 = vunpack.c.l.b16 %v465
    %v505 = vunpack.c.l.b16 %v466
    %v506 = vunpack.c.l.b16 %v467
    %v507 = vunpack.c.l.b16 %v468
    %v508 = vpack.c.b16 %v493, %v492
    %v509 = vpack.c.b16 %v495, %v494
    %v510 = vpack.c.b16 %v497, %v496
    %v511 = vpack.c.b16 %v499, %v498
    %v512 = vpack.c.b16 %v501, %v500
    %v513 = vpack.c.b16 %v503, %v502
    %v514 = vpack.c.b16 %v505, %v504
    %v515 = vpack.c.b16 %v507, %v506
    %524 = vmatprep.subr.bf16.mxu0 0
    %525 = vmatpush1.bf16.msra.mxu0 %v508
    %526 = vmatprep.subr.bf16.mxu0 0
    %527 = vmatpush1.bf16.msra.mxu0 %v509
    %528 = vmatprep.subr.bf16.mxu0 0
    %529 = vmatpush1.bf16.msra.mxu0 %v510
    %530 = vmatprep.subr.bf16.mxu0 0
    %531 = vmatpush1.bf16.msra.mxu0 %v511
    %532 = vmatprep.subr.bf16.mxu0 0
    %533 = vmatpush1.bf16.msra.mxu0 %v512
    %534 = vmatprep.subr.bf16.mxu0 0
    %535 = vmatpush1.bf16.msra.mxu0 %v513
    %536 = vmatprep.subr.bf16.mxu0 0
    %537 = vmatpush1.bf16.msra.mxu0 %v514
    %538 = vmatprep.subr.bf16.mxu0 0
    %539 = vmatpush1.bf16.msra.mxu0 %v515
    %540 = vmatprep.subr.bf16.mxu0 0
    %541 = vmatpush1.bf16.msra.mxu0 0
    %542 = vmatprep.subr.bf16.mxu0 0
    %543 = vmatpush1.bf16.msra.mxu0 0
    %544 = vmatprep.subr.bf16.mxu0 0
    %545 = vmatpush1.bf16.msra.mxu0 0
    %546 = vmatprep.subr.bf16.mxu0 0
    %547 = vmatpush1.bf16.msra.mxu0 0
    %548 = vmatprep.subr.bf16.mxu0 0
    %549 = vmatpush1.bf16.msra.mxu0 0
    %550 = vmatprep.subr.bf16.mxu0 0
    %551 = vmatpush1.bf16.msra.mxu0 0
    %552 = vmatprep.subr.bf16.mxu0 0
    %553 = vmatpush1.bf16.msra.mxu0 0
    %554 = vmatprep.subr.bf16.mxu0 0
    %555 = vmatpush1.bf16.msra.mxu0 0
    %556 = vmatprep.mubr.bf16.mxu0 0
    %557 = vmatmul.mubr.bf16.gmra.mrb[0].mxu0 %v452
    %v558 = vpop.f32.mrb[0].mxu0
    %v559 = vadd.f32 %v474, %v558
    %v560 = vpop.f32.mrb[0].mxu0
    %v561 = vpop.f32.mrb[0].mxu0
    %v562 = vadd.f32 %v474, %v561
    %v563 = vpop.f32.mrb[0].mxu0
    %564 = vdwg.mxu0
    %v565 = vpack.c.bf16 %v562, %v559
    %v567 = vunpack.c.l.b16 %v565
    %v568 = vunpack.c.h.b16 %v565
    %v569 = vpack.c.b16 %v567, %v567
    %v570 = vpack.c.b16 %v568, %v568
    %573 = vst [vmem:[#allocation11] sm:$0xf] %v569
    %574 = vst [vmem:[#allocation11 + $0x4] sm:$0xf] %v570
    // Predicated region
    $region58: #{tpu_custom_call.1} parent=1 // pred_check
      _
    $region59: #{tpu_custom_call.1} parent=1 // pred_check_branch
      %576 = sbr.rel (0) target = $region61
    $region60: #{tpu_custom_call.1} parent=1 // pred_region
      %s578 = ssub.s32 128, 128
      %579 = vsyncadd [#allocation4], %s578
      %s580 = sshll.u32 [#allocation11], 4
      %s581 = int_to_ptr.vmem [resolvable:$true] %s580
      %586 = dma.vmem_to_hbm [thread:$0]  %s581, 128, %s9, [#allocation4], 64, 64, 4
    $region61: #{tpu_custom_call.1} parent=1 // pred_fallthru
      _
    // Predicated region
    $region62: #{tpu_custom_call.1} parent=1 // pred_check
      _
    $region63: #{tpu_custom_call.1} parent=1 // pred_check_branch
      %588 = sbr.rel (0) target = $region65
    $region64: #{tpu_custom_call.1} parent=1 // pred_region
      %589 = dma.done [#allocation4], 128
    $region65: #{tpu_custom_call.1} parent=1 // pred_fallthru
      _
    %590 = vsyncpa [#allocation3], 1
    %591 = vsyncpa [#allocation6], 1
    %592 = vsyncpa [#allocation9], 1
    %593 = vsyncpa [#allocation4], 1

</llo_original>
